<compile_context>
chip_gen: v5e
topology: v5e:2x2
jax: 0.10.0
libtpu: 0.0.40
codegen_flags: <defaults>
</compile_context>

<pallas_src>
import math

import jax
import jax.numpy as jnp
from jax import lax
from jax.experimental import pallas as pl
from jax.experimental.pallas import tpu as pltpu


def _default_vmem_budget():
    """Per-step VMEM budget derived from the attached TPU's physical VMEM."""
    cap = 64 * 1024 * 1024
    try:
        info = pltpu.get_tpu_info()
        cap = int(getattr(info, "vmem_capacity_bytes", cap) or cap)
    except Exception:
        pass
    # ~3/8 of physical VMEM: 48 MiB on v5e/v6e (128 MiB), 24 MiB on v7x (64 MiB).
    return max(12 * 1024 * 1024, min(48 * 1024 * 1024, (3 * cap) // 8))


def _vmem_estimate_bytes(bblk, band, W, C, itemsize, aligned):
    """Rough per-step VMEM footprint (double-buffered I/O + scratch + params)."""
    wc = W * C
    io = 2 * 2 * bblk * band * wc * itemsize       # in band + out band, 2x buffered
    halo = 2 * bblk * 2 * wc * itemsize            # merged (top,bot) halo rows, 2x buffered
    if aligned:
        scratch = bblk * (band + 9) * (W + 2) * C * 4      # one padded f32 scratch
    else:
        scratch = 3 * bblk * (band + 9) * wc * 4           # ctr / lft / rgt f32 scratches
    params = 2 * (9 + 1) * wc * 4                  # tiled f32 weights + bias
    return io + halo + scratch + params


def _pick_tiles(B, H, W, C, itemsize, budget, aligned):
    """Pick (band_rows, batch_block).

    Priorities: (1) fit the VMEM budget, (2) keep >= 2 grid steps when the
    problem allows it (v7x has 2 TensorCores; a 1-step grid idles one of them),
    (3) make per-step blocks as large as possible (targeting >= ~1 MiB) so DMAs
    reach the HBM roofline and the ~600-cycle per-step overhead is amortized.
    """
    q = max(8, 32 // max(itemsize, 1))             # sublane quantum: 8 f32 / 16 bf16
    h_cands = sorted({H} | {d for d in range(q, H + 1, q) if H % d == 0})
    b_cands = [d for d in range(1, B + 1) if B % d == 0]
    feas = [(th, bb) for th in h_cands for bb in b_cands
            if _vmem_estimate_bytes(bb, th, W, C, itemsize, aligned) <= budget]
    if not feas:
        return min(h_cands), 1
    min_block = 1 << 20

    def score(cfg):
        th, bb = cfg
        steps = (B // bb) * (H // th)
        blk = bb * th * W * C * itemsize
        return (steps >= 2, min(blk, min_block), blk, -steps)

    return max(feas, key=score)


def _make_kernel(Bblk, tH, W, C, aligned):
    """Build the per-step kernel body and its scratch list (tap loops unroll)."""
    WC = W * C
    f32 = jnp.float32

    if aligned:
        # C % 128 == 0: every lane offset dw*C is vreg-aligned -> a single
        # zero-padded scratch is cheapest (no lane-shift passes at all).
        def kernel(xm_ref, hl_ref, w_ref, b_ref, o_ref, xp_ref):
            # Zero halo columns (2*C lanes out of (W+2)*C; written every step --
            # on v7x each TensorCore has its own copy of the scratch).
            zcol = jnp.zeros((Bblk, tH + 2, C), f32)
            xp_ref[:, 7:9 + tH, 0:C] = zcol
            xp_ref[:, 7:9 + tH, C + WC:2 * C + WC] = zcol
            # (8,128)-aligned staging: band at sublane offset 8 / lane offset C
            # (C % 128 == 0), halo rows at 7 and 8+tH.  Single f32 promotion.
            xp_ref[:, 8:8 + tH, C:C + WC] = xm_ref[...].astype(f32)
            xp_ref[:, 7:8, C:C + WC] = hl_ref[:, 0, 0:1, :].astype(f32)
            xp_ref[:, 8 + tH:9 + tH, C:C + WC] = hl_ref[:, 0, 1:2, :].astype(f32)

            w = w_ref[...]                                   # (3,3,WC) f32, loaded once
            acc = jnp.broadcast_to(b_ref[0, :], (Bblk, tH, WC))
            for dh in range(3):
                for dw in range(3):
                    tap = xp_ref[:, 7 + dh:7 + dh + tH, dw * C:dw * C + WC]
                    acc = acc + tap * w[dh, dw, :]
            o_ref[...] = acc.astype(o_ref.dtype)

        scratch = [pltpu.VMEM((Bblk, tH + 9, (W + 2) * C), f32)]
        return kernel, scratch

    # C % 128 != 0: dw*C tap slices would cross vreg lane boundaries and Mosaic
    # would materialize a shifted full-band copy per tap (9x).  Instead build
    # three lane-ALIGNED buffers (center, left-shifted, right-shifted) with
    # exactly two lane-shift passes; all 9 taps below are sublane-offset-only
    # slices of those buffers.
    def kernel(xm_ref, hl_ref, w_ref, b_ref, o_ref, ctr_ref, lft_ref, rgt_ref):
        # (8,128)-aligned staging of the band (+ halo rows); one f32 cast.
        ctr_ref[:, 8:8 + tH, :] = xm_ref[...].astype(f32)
        ctr_ref[:, 7:8, :] = hl_ref[:, 0, 0:1, :].astype(f32)
        ctr_ref[:, 8 + tH:9 + tH, :] = hl_ref[:, 0, 1:2, :].astype(f32)

        # One-pixel lane shifts (the only two shift passes per band).
        zcol = jnp.zeros((Bblk, tH + 2, C), f32)
        lft_ref[:, 7:9 + tH, 0:WC - C] = ctr_ref[:, 7:9 + tH, C:WC]   # pixel at w+1
        lft_ref[:, 7:9 + tH, WC - C:WC] = zcol                        # right-edge pad
        rgt_ref[:, 7:9 + tH, C:WC] = ctr_ref[:, 7:9 + tH, 0:WC - C]   # pixel at w-1
        rgt_ref[:, 7:9 + tH, 0:C] = zcol                              # left-edge pad

        w = w_ref[...]                                       # (3,3,WC) f32, loaded once
        acc = jnp.broadcast_to(b_ref[0, :], (Bblk, tH, WC))
        for dh in range(3):
            acc = acc + rgt_ref[:, 7 + dh:7 + dh + tH, :] * w[dh, 0, :]
            acc = acc + ctr_ref[:, 7 + dh:7 + dh + tH, :] * w[dh, 1, :]
            acc = acc + lft_ref[:, 7 + dh:7 + dh + tH, :] * w[dh, 2, :]
        o_ref[...] = acc.astype(o_ref.dtype)

    scratch = [pltpu.VMEM((Bblk, tH + 9, WC), f32) for _ in range(3)]
    return kernel, scratch


def pos_cnn_forward(x, weight, bias, H=None, W=None, s=1, *,
                    band_rows=None, batch_block=None, vmem_budget_bytes=None):
    """PosCNN forward.

    x      : (B, N, C)
    weight : (C, 1, 3, 3)   PyTorch depthwise Conv2d weight layout
    bias   : (C,)
    returns: (B, N, C)
    """
    B, N, C = x.shape
    H = H or int(math.sqrt(N))
    W = W or int(math.sqrt(N))
    assert H * W == N, "H*W must equal N"
    assert W >= 2, "W must be >= 2"
    assert s == 1, "only s == 1 (residual path) implemented"
    # TODO(synk): stride s != 1 (strided depthwise conv, no residual) not implemented.

    WC = W * C
    itemsize = jnp.dtype(x.dtype).itemsize
    aligned = (C % 128 == 0)
    budget = vmem_budget_bytes if vmem_budget_bytes is not None else _default_vmem_budget()

    auto_th, auto_bb = _pick_tiles(B, H, W, C, itemsize, budget, aligned)
    tH = band_rows if band_rows is not None else auto_th
    Bblk = batch_block if batch_block is not None else auto_bb
    assert H % tH == 0, "band_rows must divide H"
    assert B % Bblk == 0, "batch_block must divide B"
    nb = H // tH

    # Tie the scoped VMEM limit to the actual per-step footprint so user-supplied
    # tiles can't silently exceed a hard-coded limit.
    est = _vmem_estimate_bytes(Bblk, tH, W, C, itemsize, aligned)
    vmem_limit = max(32 * 1024 * 1024, min(128 * 1024 * 1024, int(1.5 * est)))

    # (B, N, C) -> (B, H, W*C): pure view change, no HBM pass.
    x3 = x.reshape(B, H, WC)

    # Halo rows for every band, merged into ONE side input:
    #   halo[:, j, 0, :] = row just above band j (zeros at the image top)
    #   halo[:, j, 1, :] = row just below band j (zeros at the image bottom)
    zrow = jnp.zeros((B, 1, WC), x.dtype)
    if nb > 1:
        top = jnp.concatenate([zrow, x3[:, tH - 1::tH, :][:, :nb - 1, :]], axis=1)
        bot = jnp.concatenate([x3[:, tH::tH, :], zrow], axis=1)
    else:
        top, bot = zrow, zrow
    halo = jnp.stack([top, bot], axis=2)                  # (B, nb, 2, WC)

    # (C, 1, 3, 3) -> (3, 3, C); fold the residual into the center tap, then tile
    # across W so each tap weight lines up with the (W*C,) lane axis.
    w_hwc = jnp.transpose(weight[:, 0, :, :], (1, 2, 0)).astype(jnp.float32)
    w_hwc = w_hwc.at[1, 1, :].add(1.0)                    # residual fold (s == 1)
    w_tiled = jnp.tile(w_hwc, (1, 1, W))                  # (3, 3, W*C), f32
    b_tiled = jnp.tile(bias.astype(jnp.float32), (W,)).reshape(1, WC)

    kernel, scratch_shapes = _make_kernel(Bblk, tH, W, C, aligned)

    out3 = pl.pallas_call(
        kernel,
        out_shape=jax.ShapeDtypeStruct((B, H, WC), x.dtype),
        grid_spec=pltpu.PrefetchScalarGridSpec(
            num_scalar_prefetch=0,
            grid=(B // Bblk, nb),
            in_specs=[
                # NOTE: on v6e, if xprof shows exposed DMA after the shift/cast
                # fixes, add pipeline_mode=pl.Buffered(3) to this spec.
                pl.BlockSpec((Bblk, tH, WC), lambda bb, j: (bb, j, 0)),
                pl.BlockSpec((Bblk, 1, 2, WC), lambda bb, j: (bb, j, 0, 0)),
                pl.BlockSpec((3, 3, WC), lambda bb, j: (0, 0, 0)),
                pl.BlockSpec((1, WC), lambda bb, j: (0, 0)),
            ],
            out_specs=pl.BlockSpec((Bblk, tH, WC), lambda bb, j: (bb, j, 0)),
            scratch_shapes=scratch_shapes,
        ),
        compiler_params=pltpu.CompilerParams(
            dimension_semantics=("parallel", "parallel"),
            vmem_limit_bytes=vmem_limit,
        ),
    )(x3, halo, w_tiled, b_tiled)

    # (B, H, W*C) -> (B, N, C): free view change.
    return out3.reshape(B, N, C)


def _reference(x, weight, bias, H, W):
    """Pure-JAX reference (lax depthwise conv + residual) for verification."""
    B, N, C = x.shape
    cnn_feat = jnp.transpose(x, (0, 2, 1)).reshape(B, C, H, W)
    y = lax.conv_general_dilated(
        cnn_feat, weight,
        window_strides=(1, 1), padding=((1, 1), (1, 1)),
        dimension_numbers=("NCHW", "OIHW", "NCHW"),
        feature_group_count=C,
    ) + bias.reshape(1, C, 1, 1)
    y = y + cnn_feat
    return jnp.transpose(y.reshape(B, C, H * W), (0, 2, 1))


if __name__ == "__main__":
    key = jax.random.PRNGKey(0)
    k = jax.random.split(key, 9)

    # --- Test 1: C % 128 != 0 -> 3-buffer shifted path; picker keeps 2 grid steps ---
    B, H, W, C = 2, 8, 8, 32
    x = jax.random.normal(k[0], (B, H * W, C), dtype=jnp.float32)
    w = jax.random.normal(k[1], (C, 1, 3, 3), dtype=jnp.float32) * 0.1
    b = jax.random.normal(k[2], (C,), dtype=jnp.float32) * 0.1
    out = jax.block_until_ready(pos_cnn_forward(x, w, b, H=H, W=W, s=1))
    ref = jax.block_until_ready(_reference(x, w, b, H, W))
    assert out.shape == (B, H * W, C)
    assert jnp.allclose(out, ref, atol=1e-5, rtol=1e-5), "test1 mismatch vs reference"

    # --- Test 2: multi-band row tiling (exercises the halo-row path) ---
    B2, H2, W2, C2 = 1, 16, 16, 32
    x2 = jax.random.normal(k[3], (B2, H2 * W2, C2), dtype=jnp.float32)
    w2 = jax.random.normal(k[4], (C2, 1, 3, 3), dtype=jnp.float32) * 0.1
    b2 = jax.random.normal(k[5], (C2,), dtype=jnp.float32) * 0.1
    out2 = jax.block_until_ready(
        pos_cnn_forward(x2, w2, b2, H=H2, W=W2, s=1, band_rows=8, batch_block=1))
    ref2 = jax.block_until_ready(_reference(x2, w2, b2, H2, W2))
    assert jnp.allclose(out2, ref2, atol=1e-5, rtol=1e-5), "test2 mismatch vs reference"

    # --- Test 3: C % 128 == 0 -> aligned padded-scratch path (no lane shifts) ---
    B3, H3, W3, C3 = 2, 8, 8, 128
    x3 = jax.random.normal(k[6], (B3, H3 * W3, C3), dtype=jnp.float32)
    w3 = jax.random.normal(k[7], (C3, 1, 3, 3), dtype=jnp.float32) * 0.1
    b3 = jax.random.normal(k[8], (C3,), dtype=jnp.float32) * 0.1
    out3 = jax.block_until_ready(pos_cnn_forward(x3, w3, b3, H=H3, W=W3, s=1))
    ref3 = jax.block_until_ready(_reference(x3, w3, b3, H3, W3))
    assert jnp.allclose(out3, ref3, atol=1e-5, rtol=1e-5), "test3 mismatch vs reference"

    # --- Test 4: bf16 activations (single f32 staging cast; f32 accumulation) ---
    x4 = x2.astype(jnp.bfloat16)
    out4 = jax.block_until_ready(pos_cnn_forward(x4, w2, b2, H=H2, W=W2, s=1))
    ref4 = jax.block_until_ready(_reference(x4.astype(jnp.float32), w2, b2, H2, W2))
    assert out4.dtype == jnp.bfloat16
    assert jnp.allclose(out4.astype(jnp.float32), ref4, atol=5e-2, rtol=5e-2), \
        "test4 mismatch vs reference"

    print("KERNEL_OK")
</pallas_src>

<mosaic_0001>
module attributes {stable_mosaic.version = 11 : i64} {
  func.func @kernel(%arg0: i32, %arg1: i32, %arg2: memref<1x8x256xf32, #tpu.memory_space<vmem>>, %arg3: memref<1x1x2x256xf32, #tpu.memory_space<vmem>>, %arg4: memref<3x3x256xf32, #tpu.memory_space<vmem>>, %arg5: memref<1x256xf32, #tpu.memory_space<vmem>>, %arg6: memref<1x8x256xf32, #tpu.memory_space<vmem>>, %arg7: memref<1x17x256xf32, #tpu.memory_space<vmem>>, %arg8: memref<1x17x256xf32, #tpu.memory_space<vmem>>, %arg9: memref<1x17x256xf32, #tpu.memory_space<vmem>>) attributes {dimension_semantics = [#tpu.dimension_semantics<parallel>, #tpu.dimension_semantics<parallel>], iteration_bounds = array<i64: 2, 1>, scalar_prefetch = 0 : i64, scratch_operands = 3 : i64, tpu.core_type = #tpu.core_type<tc>, window_params = [{transform_indices = @transform_0, window_bounds = array<i64: 1, 8, 256>}, {transform_indices = @transform_1, window_bounds = array<i64: 1, 1, 2, 256>}, {pipeline_mode = #tpu.pipeline_mode<synchronous>, transform_indices = @transform_2, window_bounds = array<i64: 3, 3, 256>}, {pipeline_mode = #tpu.pipeline_mode<synchronous>, transform_indices = @transform_3, window_bounds = array<i64: 1, 256>}, {transform_indices = @transform_4, window_bounds = array<i64: 1, 8, 256>}]} {
    %c0 = arith.constant 0 : index
    %c0_0 = arith.constant 0 : index
    %c0_1 = arith.constant 0 : index
    %0 = vector.load %arg2[%c0, %c0_0, %c0_1] : memref<1x8x256xf32, #tpu.memory_space<vmem>>, vector<1x8x256xf32>
    %c0_2 = arith.constant 0 : index
    %c8 = arith.constant 8 : index
    %c0_3 = arith.constant 0 : index
    %1 = vector.load %arg7[%c0_2, %c8, %c0_3] : memref<1x17x256xf32, #tpu.memory_space<vmem>>, vector<1x8x256xf32>
    tpu.vector_store %arg7[%c0_2, %c8, %c0_3], %0 {strides = array<i32>} : memref<1x17x256xf32, #tpu.memory_space<vmem>>, vector<1x8x256xf32>,
    %c0_4 = arith.constant 0 : index
    %c0_5 = arith.constant 0 : index
    %c0_6 = arith.constant 0 : index
    %c0_7 = arith.constant 0 : index
    %2 = vector.load %arg3[%c0_4, %c0_5, %c0_6, %c0_7] : memref<1x1x2x256xf32, #tpu.memory_space<vmem>>, vector<1x1x1x256xf32>
    %3 = vector.shape_cast %2 : vector<1x1x1x256xf32> to vector<1x1x256xf32>
    %c0_8 = arith.constant 0 : index
    %c7 = arith.constant 7 : index
    %c0_9 = arith.constant 0 : index
    %4 = vector.load %arg7[%c0_8, %c7, %c0_9] : memref<1x17x256xf32, #tpu.memory_space<vmem>>, vector<1x1x256xf32>
    tpu.vector_store %arg7[%c0_8, %c7, %c0_9], %3 {strides = array<i32>} : memref<1x17x256xf32, #tpu.memory_space<vmem>>, vector<1x1x256xf32>,
    %c0_10 = arith.constant 0 : index
    %c0_11 = arith.constant 0 : index
    %c1 = arith.constant 1 : index
    %c0_12 = arith.constant 0 : index
    %5 = vector.load %arg3[%c0_10, %c0_11, %c1, %c0_12] : memref<1x1x2x256xf32, #tpu.memory_space<vmem>>, vector<1x1x1x256xf32>
    %6 = vector.shape_cast %5 : vector<1x1x1x256xf32> to vector<1x1x256xf32>
    %c0_13 = arith.constant 0 : index
    %c16 = arith.constant 16 : index
    %c0_14 = arith.constant 0 : index
    %7 = vector.load %arg7[%c0_13, %c16, %c0_14] : memref<1x17x256xf32, #tpu.memory_space<vmem>>, vector<1x1x256xf32>
    tpu.vector_store %arg7[%c0_13, %c16, %c0_14], %6 {strides = array<i32>} : memref<1x17x256xf32, #tpu.memory_space<vmem>>, vector<1x1x256xf32>,
    %cst = arith.constant 0.000000e+00 : f32
    %8 = vector.broadcast %cst : f32 to vector<1x10x32xf32>
    %c0_15 = arith.constant 0 : index
    %c7_16 = arith.constant 7 : index
    %c32 = arith.constant 32 : index
    %9 = vector.load %arg7[%c0_15, %c7_16, %c32] : memref<1x17x256xf32, #tpu.memory_space<vmem>>, vector<1x10x224xf32>
    %c0_17 = arith.constant 0 : index
    %c7_18 = arith.constant 7 : index
    %c0_19 = arith.constant 0 : index
    %10 = vector.load %arg8[%c0_17, %c7_18, %c0_19] : memref<1x17x256xf32, #tpu.memory_space<vmem>>, vector<1x10x224xf32>
    tpu.vector_store %arg8[%c0_17, %c7_18, %c0_19], %9 {strides = array<i32>} : memref<1x17x256xf32, #tpu.memory_space<vmem>>, vector<1x10x224xf32>,
    %c0_20 = arith.constant 0 : index
    %c7_21 = arith.constant 7 : index
    %c224 = arith.constant 224 : index
    %11 = vector.load %arg8[%c0_20, %c7_21, %c224] : memref<1x17x256xf32, #tpu.memory_space<vmem>>, vector<1x10x32xf32>
    tpu.vector_store %arg8[%c0_20, %c7_21, %c224], %8 {strides = array<i32>} : memref<1x17x256xf32, #tpu.memory_space<vmem>>, vector<1x10x32xf32>,
    %c0_22 = arith.constant 0 : index
    %c7_23 = arith.constant 7 : index
    %c0_24 = arith.constant 0 : index
    %12 = vector.load %arg7[%c0_22, %c7_23, %c0_24] : memref<1x17x256xf32, #tpu.memory_space<vmem>>, vector<1x10x224xf32>
    %c0_25 = arith.constant 0 : index
    %c7_26 = arith.constant 7 : index
    %c32_27 = arith.constant 32 : index
    %13 = vector.load %arg9[%c0_25, %c7_26, %c32_27] : memref<1x17x256xf32, #tpu.memory_space<vmem>>, vector<1x10x224xf32>
    tpu.vector_store %arg9[%c0_25, %c7_26, %c32_27], %12 {strides = array<i32>} : memref<1x17x256xf32, #tpu.memory_space<vmem>>, vector<1x10x224xf32>,
    %c0_28 = arith.constant 0 : index
    %c7_29 = arith.constant 7 : index
    %c0_30 = arith.constant 0 : index
    %14 = vector.load %arg9[%c0_28, %c7_29, %c0_30] : memref<1x17x256xf32, #tpu.memory_space<vmem>>, vector<1x10x32xf32>
    tpu.vector_store %arg9[%c0_28, %c7_29, %c0_30], %8 {strides = array<i32>} : memref<1x17x256xf32, #tpu.memory_space<vmem>>, vector<1x10x32xf32>,
    %c0_31 = arith.constant 0 : index
    %c0_32 = arith.constant 0 : index
    %c0_33 = arith.constant 0 : index
    %15 = vector.load %arg4[%c0_31, %c0_32, %c0_33] : memref<3x3x256xf32, #tpu.memory_space<vmem>>, vector<3x3x256xf32>
    %c0_34 = arith.constant 0 : index
    %c0_35 = arith.constant 0 : index
    %16 = vector.load %arg5[%c0_34, %c0_35] : memref<1x256xf32, #tpu.memory_space<vmem>>, vector<1x256xf32>
    %17 = vector.shape_cast %16 : vector<1x256xf32> to vector<256xf32>
    %18 = vector.shape_cast %17 : vector<256xf32> to vector<1x1x256xf32>
    %19 = vector.broadcast %18 : vector<1x1x256xf32> to vector<1x8x256xf32>
    %c0_36 = arith.constant 0 : index
    %c7_37 = arith.constant 7 : index
    %c0_38 = arith.constant 0 : index
    %20 = vector.load %arg9[%c0_36, %c7_37, %c0_38] : memref<1x17x256xf32, #tpu.memory_space<vmem>>, vector<1x8x256xf32>
    %21 = vector.extract_strided_slice %15 {offsets = [0, 0, 0], sizes = [1, 1, 256], strides = [1, 1, 1]} : vector<3x3x256xf32> to vector<1x1x256xf32>
    %22 = vector.shape_cast %21 : vector<1x1x256xf32> to vector<256xf32>
    %23 = vector.shape_cast %22 : vector<256xf32> to vector<1x1x256xf32>
    %24 = vector.broadcast %23 : vector<1x1x256xf32> to vector<1x8x256xf32>
    %25 = arith.mulf %20, %24 : vector<1x8x256xf32>
    %26 = arith.addf %19, %25 : vector<1x8x256xf32>
    %c0_39 = arith.constant 0 : index
    %c7_40 = arith.constant 7 : index
    %c0_41 = arith.constant 0 : index
    %27 = vector.load %arg7[%c0_39, %c7_40, %c0_41] : memref<1x17x256xf32, #tpu.memory_space<vmem>>, vector<1x8x256xf32>
    %28 = vector.extract_strided_slice %15 {offsets = [0, 1, 0], sizes = [1, 1, 256], strides = [1, 1, 1]} : vector<3x3x256xf32> to vector<1x1x256xf32>
    %29 = vector.shape_cast %28 : vector<1x1x256xf32> to vector<256xf32>
    %30 = vector.shape_cast %29 : vector<256xf32> to vector<1x1x256xf32>
    %31 = vector.broadcast %30 : vector<1x1x256xf32> to vector<1x8x256xf32>
    %32 = arith.mulf %27, %31 : vector<1x8x256xf32>
    %33 = arith.addf %26, %32 : vector<1x8x256xf32>
    %c0_42 = arith.constant 0 : index
    %c7_43 = arith.constant 7 : index
    %c0_44 = arith.constant 0 : index
    %34 = vector.load %arg8[%c0_42, %c7_43, %c0_44] : memref<1x17x256xf32, #tpu.memory_space<vmem>>, vector<1x8x256xf32>
    %35 = vector.extract_strided_slice %15 {offsets = [0, 2, 0], sizes = [1, 1, 256], strides = [1, 1, 1]} : vector<3x3x256xf32> to vector<1x1x256xf32>
    %36 = vector.shape_cast %35 : vector<1x1x256xf32> to vector<256xf32>
    %37 = vector.shape_cast %36 : vector<256xf32> to vector<1x1x256xf32>
    %38 = vector.broadcast %37 : vector<1x1x256xf32> to vector<1x8x256xf32>
    %39 = arith.mulf %34, %38 : vector<1x8x256xf32>
    %40 = arith.addf %33, %39 : vector<1x8x256xf32>
    %c0_45 = arith.constant 0 : index
    %c8_46 = arith.constant 8 : index
    %c0_47 = arith.constant 0 : index
    %41 = vector.load %arg9[%c0_45, %c8_46, %c0_47] : memref<1x17x256xf32, #tpu.memory_space<vmem>>, vector<1x8x256xf32>
    %42 = vector.extract_strided_slice %15 {offsets = [1, 0, 0], sizes = [1, 1, 256], strides = [1, 1, 1]} : vector<3x3x256xf32> to vector<1x1x256xf32>
    %43 = vector.shape_cast %42 : vector<1x1x256xf32> to vector<256xf32>
    %44 = vector.shape_cast %43 : vector<256xf32> to vector<1x1x256xf32>
    %45 = vector.broadcast %44 : vector<1x1x256xf32> to vector<1x8x256xf32>
    %46 = arith.mulf %41, %45 : vector<1x8x256xf32>
    %47 = arith.addf %40, %46 : vector<1x8x256xf32>
    %c0_48 = arith.constant 0 : index
    %c8_49 = arith.constant 8 : index
    %c0_50 = arith.constant 0 : index
    %48 = vector.load %arg7[%c0_48, %c8_49, %c0_50] : memref<1x17x256xf32, #tpu.memory_space<vmem>>, vector<1x8x256xf32>
    %49 = vector.extract_strided_slice %15 {offsets = [1, 1, 0], sizes = [1, 1, 256], strides = [1, 1, 1]} : vector<3x3x256xf32> to vector<1x1x256xf32>
    %50 = vector.shape_cast %49 : vector<1x1x256xf32> to vector<256xf32>
    %51 = vector.shape_cast %50 : vector<256xf32> to vector<1x1x256xf32>
    %52 = vector.broadcast %51 : vector<1x1x256xf32> to vector<1x8x256xf32>
    %53 = arith.mulf %48, %52 : vector<1x8x256xf32>
    %54 = arith.addf %47, %53 : vector<1x8x256xf32>
    %c0_51 = arith.constant 0 : index
    %c8_52 = arith.constant 8 : index
    %c0_53 = arith.constant 0 : index
    %55 = vector.load %arg8[%c0_51, %c8_52, %c0_53] : memref<1x17x256xf32, #tpu.memory_space<vmem>>, vector<1x8x256xf32>
    %56 = vector.extract_strided_slice %15 {offsets = [1, 2, 0], sizes = [1, 1, 256], strides = [1, 1, 1]} : vector<3x3x256xf32> to vector<1x1x256xf32>
    %57 = vector.shape_cast %56 : vector<1x1x256xf32> to vector<256xf32>
    %58 = vector.shape_cast %57 : vector<256xf32> to vector<1x1x256xf32>
    %59 = vector.broadcast %58 : vector<1x1x256xf32> to vector<1x8x256xf32>
    %60 = arith.mulf %55, %59 : vector<1x8x256xf32>
    %61 = arith.addf %54, %60 : vector<1x8x256xf32>
    %c0_54 = arith.constant 0 : index
    %c9 = arith.constant 9 : index
    %c0_55 = arith.constant 0 : index
    %62 = vector.load %arg9[%c0_54, %c9, %c0_55] : memref<1x17x256xf32, #tpu.memory_space<vmem>>, vector<1x8x256xf32>
    %63 = vector.extract_strided_slice %15 {offsets = [2, 0, 0], sizes = [1, 1, 256], strides = [1, 1, 1]} : vector<3x3x256xf32> to vector<1x1x256xf32>
    %64 = vector.shape_cast %63 : vector<1x1x256xf32> to vector<256xf32>
    %65 = vector.shape_cast %64 : vector<256xf32> to vector<1x1x256xf32>
    %66 = vector.broadcast %65 : vector<1x1x256xf32> to vector<1x8x256xf32>
    %67 = arith.mulf %62, %66 : vector<1x8x256xf32>
    %68 = arith.addf %61, %67 : vector<1x8x256xf32>
    %c0_56 = arith.constant 0 : index
    %c9_57 = arith.constant 9 : index
    %c0_58 = arith.constant 0 : index
    %69 = vector.load %arg7[%c0_56, %c9_57, %c0_58] : memref<1x17x256xf32, #tpu.memory_space<vmem>>, vector<1x8x256xf32>
    %70 = vector.extract_strided_slice %15 {offsets = [2, 1, 0], sizes = [1, 1, 256], strides = [1, 1, 1]} : vector<3x3x256xf32> to vector<1x1x256xf32>
    %71 = vector.shape_cast %70 : vector<1x1x256xf32> to vector<256xf32>
    %72 = vector.shape_cast %71 : vector<256xf32> to vector<1x1x256xf32>
    %73 = vector.broadcast %72 : vector<1x1x256xf32> to vector<1x8x256xf32>
    %74 = arith.mulf %69, %73 : vector<1x8x256xf32>
    %75 = arith.addf %68, %74 : vector<1x8x256xf32>
    %c0_59 = arith.constant 0 : index
    %c9_60 = arith.constant 9 : index
    %c0_61 = arith.constant 0 : index
    %76 = vector.load %arg8[%c0_59, %c9_60, %c0_61] : memref<1x17x256xf32, #tpu.memory_space<vmem>>, vector<1x8x256xf32>
    %77 = vector.extract_strided_slice %15 {offsets = [2, 2, 0], sizes = [1, 1, 256], strides = [1, 1, 1]} : vector<3x3x256xf32> to vector<1x1x256xf32>
    %78 = vector.shape_cast %77 : vector<1x1x256xf32> to vector<256xf32>
    %79 = vector.shape_cast %78 : vector<256xf32> to vector<1x1x256xf32>
    %80 = vector.broadcast %79 : vector<1x1x256xf32> to vector<1x8x256xf32>
    %81 = arith.mulf %76, %80 : vector<1x8x256xf32>
    %82 = arith.addf %75, %81 : vector<1x8x256xf32>
    %c0_62 = arith.constant 0 : index
    %c0_63 = arith.constant 0 : index
    %c0_64 = arith.constant 0 : index
    %83 = vector.load %arg6[%c0_62, %c0_63, %c0_64] : memref<1x8x256xf32, #tpu.memory_space<vmem>>, vector<1x8x256xf32>
    tpu.vector_store %arg6[%c0_62, %c0_63, %c0_64], %82 {strides = array<i32>} : memref<1x8x256xf32, #tpu.memory_space<vmem>>, vector<1x8x256xf32>,
    return
  }
  func.func @transform_0(%arg0: i32, %arg1: i32) -> (i32, i32, i32) {
    %c0_i32 = arith.constant 0 : i32
    %c0_i32_0 = arith.constant 0 : i32
    return %arg0, %arg1, %c0_i32 : i32, i32, i32
  }
  func.func @transform_1(%arg0: i32, %arg1: i32) -> (i32, i32, i32, i32) {
    %c0_i32 = arith.constant 0 : i32
    %c0_i32_0 = arith.constant 0 : i32
    %c0_i32_1 = arith.constant 0 : i32
    return %arg0, %arg1, %c0_i32, %c0_i32_0 : i32, i32, i32, i32
  }
  func.func @transform_2(%arg0: i32, %arg1: i32) -> (i32, i32, i32) {
    %c0_i32 = arith.constant 0 : i32
    %c0_i32_0 = arith.constant 0 : i32
    %c0_i32_1 = arith.constant 0 : i32
    %c0_i32_2 = arith.constant 0 : i32
    return %c0_i32, %c0_i32_0, %c0_i32_1 : i32, i32, i32
  }
  func.func @transform_3(%arg0: i32, %arg1: i32) -> (i32, i32) {
    %c0_i32 = arith.constant 0 : i32
    %c0_i32_0 = arith.constant 0 : i32
    %c0_i32_1 = arith.constant 0 : i32
    return %c0_i32, %c0_i32_0 : i32, i32
  }
  func.func @transform_4(%arg0: i32, %arg1: i32) -> (i32, i32, i32) {
    %c0_i32 = arith.constant 0 : i32
    %c0_i32_0 = arith.constant 0 : i32
    return %arg0, %arg1, %c0_i32 : i32, i32, i32
  }
}

</mosaic_0001>

<llo_original>
// kernel: tpu_custom_call.1
$region0: #{tpu_custom_call.1}
  #allocation0 [shape = 'u32[]', space=smem, size = 0x4, offset = 0x4, fixed_abs, tag = 'smem constant byte address 0x4 - core index']
  #allocation1 [shape = 'u32[72,128]{1,0:T(1,128)}', space=vmem, size = 0x9000, scoped, tag = 'internal scratch']
  #allocation2 [shape = 'f32[1,17,256]{2,1,0:T(8,128)}', space=vmem, size = 0x6000, scoped, tag = 'scratch operand']
  #allocation3 [shape = 'f32[1,17,256]{2,1,0:T(8,128)}', space=vmem, size = 0x6000, scoped, tag = 'scratch operand']
  #allocation4 [shape = 'f32[1,17,256]{2,1,0:T(8,128)}', space=vmem, size = 0x6000, scoped, tag = 'scratch operand']
  %s0 = inlined_call_operand.hbm [shape: f32[2,8,256], index: 0, kind: input, shape index: {}]
  %s1 = inlined_call_operand.hbm [shape: f32[2,1,2,256], index: 1, kind: input, shape index: {}]
  %s2 = inlined_call_operand.hbm [shape: f32[3,3,256], index: 2, kind: input, shape index: {}]
  %s3 = inlined_call_operand.vmem [shape: f32[1,256], index: 3, kind: input, shape index: {}]
  %s4 = inlined_call_operand.hbm [shape: f32[2,8,256], index: 4, kind: output, shape index: {}]
  %s5 = sld [smem:[#allocation0]]
  $region61: #{tpu_custom_call.1} parent=0
    _
  %s7 = ssub.s32 1, %s5
  %s8 = scalar_select 0, %s7, %s5
  $region1: #{tpu_custom_call.1} parent=0
    #allocation5 [shape = 'u8[16384]{0}', space=vmem, size = 0x4000, scoped, tag = 'input window, operand 0']
    #allocation6 [shape = 's32[2]{0}', space=sflag, size = 0x8, scoped, tag = 'scoped memory for tpu_custom_call.1']
    #allocation7 [shape = 's32[2]{0}', space=sflag, size = 0x8, scoped, tag = 'scoped memory for tpu_custom_call.1']
    #allocation8 [shape = 'u8[4096]{0}', space=vmem, size = 0x1000, scoped, tag = 'input window, operand 1']
    #allocation9 [shape = 's32[2]{0}', space=sflag, size = 0x8, scoped, tag = 'scoped memory for tpu_custom_call.1']
    #allocation10 [shape = 'u8[12288]{0}', space=vmem, size = 0x3000, scoped, tag = 'input window, operand 2, single buffered']
    #allocation11 [shape = 'u8[16384]{0}', space=vmem, size = 0x4000, scoped, tag = 'output window, operand 0']
    %9 = vsyncpa [#allocation6], 0
    %s10 = scalar_lea.sflag [#allocation6], 1
    %11 = vsyncpa %s10, 0
    %12 = vsyncpa [#allocation9], 0
    %s13 = scalar_lea.sflag [#allocation9], 1
    %14 = vsyncpa %s13, 0
    %15 = vsyncpa [#allocation7], 0
    %s16 = scalar_lea.sflag [#allocation7], 1
    %17 = vsyncpa %s16, 0
    loop: start=0, step=1, limit=4
    $region2: #{tpu_custom_call.1} parent=1 // loop_pre_header
      _
    $region3: #{tpu_custom_call.1} parent=1 // loop_header
      %s19 = sphi 0, %s23
      %p20 = scmp.ge.s32.totalorder %s19, 4
      %s26 = sphi 0, %s38
      %s27 = sphi 0, %s34
      %s28 = sphi 0, %s26
      %s29 = sphi 0, %s27
      %s30 = sphi 0, %s28
      %s31 = sphi 0, %s29
      %s43 = sphi 0, %s45
      %s46 = sphi 0, %s43
      %s47 = sphi 0, %s46
      %s63 = sphi 0, %s47
      %s71 = sphi 0, %s73
      %s74 = sphi 0, %s71
      %s75 = sphi 0, %s74
      %s91 = sphi 0, %s75
      %s95 = sphi 0, %s95
      %s97 = sphi 0, %s95
      %s98 = sphi 0, %s97
      %s112 = sphi 0, %s98
      %s116 = sphi 0, %s116
      %s118 = sphi 0, %s116
      %s119 = sphi 0, %s118
      %s133 = sphi 0, %s119
      %s141 = sphi 0, %s143
      %s144 = sphi 0, %s141
      %s145 = sphi 0, %s144
      %s161 = sphi 0, %s145
    $region4: #{tpu_custom_call.1} parent=1 // loop_header_branch
      %22 = sbr.rel (%p20) target = $region8
    $region5: #{tpu_custom_call.1} parent=1 // loop_body
      %s24 = ssub.s32 %s19, 1
      %s25 = ssub.s32 %s19, 2
      %s32 = sadd.s32 1, %s27
      %p33 = scmp.ge.s32.totalorder %s32, 1
      %s34 = scalar_select %p33, 0, %s32
      %s35 = sadd.s32 1, %s26
      %s36 = scalar_select %p33, %s35, %s26
      %p37 = scmp.ge.s32.totalorder %s36, 2
      %s38 = scalar_select %p37, 0, %s36
      %s39 = ssub.s32 %s26, %s38
      %s40 = ssub.s32 %s27, %s34
      %s41 = sor.u32 %s39, %s40
      %p42 = scmp.eq.s32.totalorder %s41, 0
      %s44 = sadd.s32 %s43, 1
      %s45 = scalar_select %p42, %s43, %s44
      %p48 = pneg %p42
      %p49 = scmp.eq.s32.totalorder %s19, 1
      %p50 = por %p48, %p49
      %p51 = scmp.ne.s32.totalorder %s43, %s46
      %p52 = scmp.eq.s32.totalorder %s19, 0
      %p53 = por %p51, %p52
      %p54 = scmp.ne.s32.totalorder %s43, %s46
      %p55 = scmp.eq.s32.totalorder %s24, 1
      %p56 = por %p54, %p55
      %p57 = scmp.ne.s32.totalorder %s46, %s47
      %p58 = scmp.eq.s32.totalorder %s24, 0
      %p59 = por %p57, %p58
      %p60 = scmp.ne.s32.totalorder %s46, %s47
      %p61 = scmp.eq.s32.totalorder %s25, 1
      %p62 = por %p60, %p61
      %p64 = scmp.ne.s32.totalorder %s47, %s63
      %p65 = scmp.eq.s32.totalorder %s25, 0
      %p66 = por %p64, %p65
      %s67 = ssub.s32 %s26, %s38
      %s68 = ssub.s32 %s27, %s34
      %s69 = sor.u32 %s67, %s68
      %p70 = scmp.eq.s32.totalorder %s69, 0
      %s72 = sadd.s32 %s71, 1
      %s73 = scalar_select %p70, %s71, %s72
      %p76 = pneg %p70
      %p77 = scmp.eq.s32.totalorder %s19, 1
      %p78 = por %p76, %p77
      %p79 = scmp.ne.s32.totalorder %s71, %s74
      %p80 = scmp.eq.s32.totalorder %s19, 0
      %p81 = por %p79, %p80
      %p82 = scmp.ne.s32.totalorder %s71, %s74
      %p83 = scmp.eq.s32.totalorder %s24, 1
      %p84 = por %p82, %p83
      %p85 = scmp.ne.s32.totalorder %s74, %s75
      %p86 = scmp.eq.s32.totalorder %s24, 0
      %p87 = por %p85, %p86
      %p88 = scmp.ne.s32.totalorder %s74, %s75
      %p89 = scmp.eq.s32.totalorder %s25, 1
      %p90 = por %p88, %p89
      %p92 = scmp.ne.s32.totalorder %s75, %s91
      %p93 = scmp.eq.s32.totalorder %s25, 0
      %p94 = por %p92, %p93
      %s96 = sadd.s32 %s95, 1
      %p99 = scmp.eq.s32.totalorder %s19, 1
      %p100 = scmp.ne.s32.totalorder %s95, %s97
      %p101 = scmp.eq.s32.totalorder %s19, 0
      %p102 = por %p100, %p101
      %p103 = scmp.ne.s32.totalorder %s95, %s97
      %p104 = scmp.eq.s32.totalorder %s24, 1
      %p105 = por %p103, %p104
      %p106 = scmp.ne.s32.totalorder %s97, %s98
      %p107 = scmp.eq.s32.totalorder %s24, 0
      %p108 = por %p106, %p107
      %p109 = scmp.ne.s32.totalorder %s97, %s98
      %p110 = scmp.eq.s32.totalorder %s25, 1
      %p111 = por %p109, %p110
      %p113 = scmp.ne.s32.totalorder %s98, %s112
      %p114 = scmp.eq.s32.totalorder %s25, 0
      %p115 = por %p113, %p114
      %s117 = sadd.s32 %s116, 1
      %p120 = scmp.eq.s32.totalorder %s19, 1
      %p121 = scmp.ne.s32.totalorder %s116, %s118
      %p122 = scmp.eq.s32.totalorder %s19, 0
      %p123 = por %p121, %p122
      %p124 = scmp.ne.s32.totalorder %s116, %s118
      %p125 = scmp.eq.s32.totalorder %s24, 1
      %p126 = por %p124, %p125
      %p127 = scmp.ne.s32.totalorder %s118, %s119
      %p128 = scmp.eq.s32.totalorder %s24, 0
      %p129 = por %p127, %p128
      %p130 = scmp.ne.s32.totalorder %s118, %s119
      %p131 = scmp.eq.s32.totalorder %s25, 1
      %p132 = por %p130, %p131
      %p134 = scmp.ne.s32.totalorder %s119, %s133
      %p135 = scmp.eq.s32.totalorder %s25, 0
      %p136 = por %p134, %p135
      %s137 = ssub.s32 %s26, %s38
      %s138 = ssub.s32 %s27, %s34
      %s139 = sor.u32 %s137, %s138
      %p140 = scmp.eq.s32.totalorder %s139, 0
      %s142 = sadd.s32 %s141, 1
      %s143 = scalar_select %p140, %s141, %s142
      %p146 = pneg %p140
      %p147 = scmp.eq.s32.totalorder %s19, 1
      %p148 = por %p146, %p147
      %p149 = scmp.ne.s32.totalorder %s141, %s144
      %p150 = scmp.eq.s32.totalorder %s19, 0
      %p151 = por %p149, %p150
      %p152 = scmp.ne.s32.totalorder %s141, %s144
      %p153 = scmp.eq.s32.totalorder %s24, 1
      %p154 = por %p152, %p153
      %p155 = scmp.ne.s32.totalorder %s144, %s145
      %p156 = scmp.eq.s32.totalorder %s24, 0
      %p157 = por %p155, %p156
      %p158 = scmp.ne.s32.totalorder %s144, %s145
      %p159 = scmp.eq.s32.totalorder %s25, 1
      %p160 = por %p158, %p159
      %p162 = scmp.ne.s32.totalorder %s145, %s161
      %p163 = scmp.eq.s32.totalorder %s25, 0
      %p164 = por %p162, %p163
      %p165 = scmp.le.s32.totalorder 1, %s19
      %p166 = scmp.lt.s32.totalorder %s19, 3
      %p167 = pnand %p165, %p166
      %p168 = pneg %p167
      // Predicated region
      $region9: #{tpu_custom_call.1} parent=5 // pred_check
        _
      $region10: #{tpu_custom_call.1} parent=5 // pred_check_branch
        %170 = sbr.rel (%p167) target = $region12
      $region11: #{tpu_custom_call.1} parent=5 // pred_region
        %s171 = ssub.s32 %s19, 1
        // Predicated region
        $region13: #{tpu_custom_call.1} parent=11 // pred_check
          %p172 = pneg %p108
        $region14: #{tpu_custom_call.1} parent=11 // pred_check_branch
          %174 = sbr.rel (%p172) target = $region16
        $region15: #{tpu_custom_call.1} parent=11 // pred_region
          %176 = vsyncadd [#allocation9], 0
          %s177 = sshll.u32 %s2, 4
          %s178 = int_to_ptr.hbm [resolvable:$true] %s177
          %s179 = sshll.u32 [#allocation10], 4
          %s180 = int_to_ptr.vmem [resolvable:$true] %s179
          %185 = dma.hbm_to_vmem [thread:$0]  %s178, 384, %s180, [#allocation9], 128, 128, 8
        $region16: #{tpu_custom_call.1} parent=11 // pred_fallthru
          _
        // Predicated region
        $region17: #{tpu_custom_call.1} parent=11 // pred_check
          %p186 = pneg %p129
        $region18: #{tpu_custom_call.1} parent=11 // pred_check_branch
          %188 = sbr.rel (%p186) target = $region20
        $region19: #{tpu_custom_call.1} parent=11 // pred_region
          _
        $region20: #{tpu_custom_call.1} parent=11 // pred_fallthru
          _
      $region12: #{tpu_custom_call.1} parent=5 // pred_fallthru
        _
      %p189 = scmp.lt.s32.totalorder %s19, 2
      // Predicated region
      $region21: #{tpu_custom_call.1} parent=5 // pred_check
        %p190 = pneg %p189
      $region22: #{tpu_custom_call.1} parent=5 // pred_check_branch
        %192 = sbr.rel (%p190) target = $region24
      $region23: #{tpu_custom_call.1} parent=5 // pred_region
        // Predicated region
        $region25: #{tpu_custom_call.1} parent=23 // pred_check
          %p193 = pneg %p53
        $region26: #{tpu_custom_call.1} parent=23 // pred_check_branch
          %195 = sbr.rel (%p193) target = $region28
        $region27: #{tpu_custom_call.1} parent=23 // pred_region
          %s196 = sand.u32 %s43, 1
          %s197 = scalar_lea.sflag [#allocation6], %s196
          %s198 = sand.u32 %s43, 1
          %s199 = smul.addr %s198, 16
          %s200 = scalar_lea.vmem [#allocation5], %s199
          %202 = vsyncadd %s197, 0
          %s203 = smul.addr %s27, 2
          %s204 = smul.addr %s26, 2
          %s205 = sadd.s32 %s203, %s204
          %s206 = smul.addr %s205, 8
          %s207 = scalar_lea.hbm %s0, %s206
          %s209 = sshll.u32 %s207, 4
          %s210 = int_to_ptr.hbm [resolvable:$true] %s209
          %s211 = sshll.u32 %s200, 4
          %s212 = int_to_ptr.vmem [resolvable:$true] %s211
          %214 = dma.hbm_to_vmem [thread:$0]  %s210, 256, %s212, %s197
        $region28: #{tpu_custom_call.1} parent=23 // pred_fallthru
          _
        // Predicated region
        $region29: #{tpu_custom_call.1} parent=23 // pred_check
          %p215 = pneg %p81
        $region30: #{tpu_custom_call.1} parent=23 // pred_check_branch
          %217 = sbr.rel (%p215) target = $region32
        $region31: #{tpu_custom_call.1} parent=23 // pred_region
          %s218 = sand.u32 %s19, 1
          %s219 = scalar_lea.sflag [#allocation9], %s218
          %s220 = sand.u32 %s71, 1
          %s221 = smul.addr %s220, 4
          %s222 = scalar_lea.vmem [#allocation8], %s221
          %224 = vsyncadd %s219, 0
          %s225 = smul.addr %s27, 2
          %s226 = smul.addr %s26, 2
          %s227 = sadd.s32 %s225, %s226
          %s228 = smul.addr %s227, 2
          %s229 = scalar_lea.hbm %s1, %s228
          %s231 = sshll.u32 %s229, 4
          %s232 = int_to_ptr.hbm [resolvable:$true] %s231
          %s233 = sshll.u32 %s222, 4
          %s234 = int_to_ptr.vmem [resolvable:$true] %s233
          %236 = dma.hbm_to_vmem [thread:$0]  %s232, 64, %s234, %s219
        $region32: #{tpu_custom_call.1} parent=23 // pred_fallthru
          _
      $region24: #{tpu_custom_call.1} parent=5 // pred_fallthru
        _
      %p237 = scmp.le.s32.totalorder 1, %s19
      %p238 = scmp.lt.s32.totalorder %s19, 3
      %p239 = pnand %p237, %p238
      %p240 = pneg %p239
      // Predicated region
      $region33: #{tpu_custom_call.1} parent=5 // pred_check
        _
      $region34: #{tpu_custom_call.1} parent=5 // pred_check_branch
        %242 = sbr.rel (%p239) target = $region36
      $region35: #{tpu_custom_call.1} parent=5 // pred_region
        %s243 = ssub.s32 %s19, 1
        %s244 = sand.u32 %s46, 1
        %s245 = scalar_lea.sflag [#allocation6], %s244
        %s246 = sand.u32 %s46, 1
        %s247 = smul.addr %s246, 16
        %s248 = scalar_lea.vmem [#allocation5], %s247
        // Predicated region
        $region37: #{tpu_custom_call.1} parent=35 // pred_check
          %p249 = pneg %p59
        $region38: #{tpu_custom_call.1} parent=35 // pred_check_branch
          %251 = sbr.rel (%p249) target = $region40
        $region39: #{tpu_custom_call.1} parent=35 // pred_region
          %253 = dma.done %s245, 256
        $region40: #{tpu_custom_call.1} parent=35 // pred_fallthru
          _
        %s254 = sand.u32 %s24, 1
        %s255 = scalar_lea.sflag [#allocation9], %s254
        %s256 = sand.u32 %s74, 1
        %s257 = smul.addr %s256, 4
        %s258 = scalar_lea.vmem [#allocation8], %s257
        // Predicated region
        $region41: #{tpu_custom_call.1} parent=35 // pred_check
          %p259 = pneg %p87
        $region42: #{tpu_custom_call.1} parent=35 // pred_check_branch
          %261 = sbr.rel (%p259) target = $region44
        $region43: #{tpu_custom_call.1} parent=35 // pred_region
          %263 = dma.done %s255, 64
        $region44: #{tpu_custom_call.1} parent=35 // pred_fallthru
          _
        // Predicated region
        $region45: #{tpu_custom_call.1} parent=35 // pred_check
          %p264 = pneg %p108
        $region46: #{tpu_custom_call.1} parent=35 // pred_check_branch
          %266 = sbr.rel (%p264) target = $region48
        $region47: #{tpu_custom_call.1} parent=35 // pred_region
          %268 = dma.done [#allocation9], 384
        $region48: #{tpu_custom_call.1} parent=35 // pred_fallthru
          _
        %s269 = sand.u32 %s46, 1
        %s270 = scalar_lea.sflag [#allocation6], %s269
        %s271 = sand.u32 %s46, 1
        %s272 = smul.addr %s271, 16
        %s273 = scalar_lea.vmem [#allocation5], %s272
        %p274 = pneg %p59
        %p275 = pneg %p56
        %s276 = sand.u32 %s24, 1
        %s277 = scalar_lea.sflag [#allocation9], %s276
        %s278 = sand.u32 %s74, 1
        %s279 = smul.addr %s278, 4
        %s280 = scalar_lea.vmem [#allocation8], %s279
        %p281 = pneg %p87
        %p282 = pneg %p84
        %p283 = pneg %p108
        %p284 = pneg %p105
        %p285 = pneg %p129
        %p286 = pneg %p126
        %p287 = pneg %p157
        %p288 = pneg %p154
        %s289 = sand.u32 %s144, 1
        %s290 = scalar_lea.sflag [#allocation7], %s289
        %s291 = sand.u32 %s144, 1
        %s292 = smul.addr %s291, 16
        %s293 = scalar_lea.vmem [#allocation11], %s292
        %v294 = vld [vmem:[%s248] sm:$0xff]
        %v295 = vld [vmem:[%s248 + $0x8] sm:$0xff]
        %296 = vst [vmem:[#allocation2 + $0x10] sm:$0xff] %v294
        %297 = vst [vmem:[#allocation2 + $0x18] sm:$0xff] %v295
        %v298 = vld [vmem:[%s258] ss:$2 sm:$0x3]
        %v299 = vlaneseq
        %vm300 = vcmp.ge.s32.totalorder %v299, 0
        %vm301 = vcmp.lt.s32.totalorder %v299, 256
        %vm302 = vmand %vm300, %vm301
        %s303 = scalar_lea.vmem [#allocation2], 7
        %304 = vst.msk [vmem:[%s303] ss:$8 sm:$0x3] %vm302, %v298
        %305 = vst.msk [vmem:[%s303] ss:$8 sm:$0x0] %vm302, %v298
        %s306 = scalar_lea.vmem %s258, 1 [#allocation8]
        %v307 = vld [vmem:[%s306] ss:$2 sm:$0x3]
        %s308 = scalar_lea.vmem [#allocation2], 32
        %309 = vst.msk [vmem:[%s308] ss:$8 sm:$0x3] %vm302, %v307
        %310 = vst.msk [vmem:[%s308] ss:$8 sm:$0x0] %vm302, %v307
        %v311 = vld [vmem:[#allocation2] sm:$0x80]
        %v312 = vld [vmem:[#allocation2 + $0x8] sm:$0x80]
        %v313 = vld [vmem:[#allocation2 + $0x10] sm:$0xff]
        %v314 = vld [vmem:[#allocation2 + $0x18] sm:$0xff]
        %v315 = vld [vmem:[#allocation2 + $0x20] sm:$0x1]
        %v316 = vld [vmem:[#allocation2 + $0x28] sm:$0x1]
        %323 = vrot.lane.b32.xlu0 %v311, 96
        %v324 = vpop.permute.xlu0 %323
        %325 = vrot.lane.b32.xlu0 %v312, 96
        %v326 = vpop.permute.xlu0 %325
        %327 = vrot.lane.b32.xlu0 %v313, 96
        %v328 = vpop.permute.xlu0 %327
        %329 = vrot.lane.b32.xlu0 %v314, 96
        %v330 = vpop.permute.xlu0 %329
        %331 = vrot.lane.b32.xlu0 %v315, 96
        %v332 = vpop.permute.xlu0 %331
        %333 = vrot.lane.b32.xlu0 %v316, 96
        %v334 = vpop.permute.xlu0 %333
        %vm335 = vcmask 785408
        %v336 = vsel %vm335, %v324, %v326
        %v337 = vsel %vm335, %v328, %v330
        %v338 = vsel %vm335, %v332, %v334
        %345 = vst [vmem:[#allocation3] sm:$0x80] %v336
        %vm346 = vcmask 785415
        %347 = vst.msk [vmem:[#allocation3 + $0x8] sm:$0x80] %vm346, %v326
        %348 = vst [vmem:[#allocation3 + $0x10] sm:$0xff] %v337
        %349 = vst.msk [vmem:[#allocation3 + $0x18] sm:$0xff] %vm335, %v330
        %350 = vst [vmem:[#allocation3 + $0x20] sm:$0x1] %v338
        %vm351 = vcmask 778240
        %352 = vst.msk [vmem:[#allocation3 + $0x28] sm:$0x1] %vm351, %v334
        %vm353 = vcmask 1048327
        %354 = vst.msk [vmem:[#allocation3 + $0x8] sm:$0x80] %vm353, 0.0
        %vm355 = vcmask 1048320
        %356 = vst.msk [vmem:[#allocation3 + $0x18] sm:$0xff] %vm355, 0.0
        %vm357 = vcmask 1041152
        %358 = vst.msk [vmem:[#allocation3 + $0x28] sm:$0x1] %vm357, 0.0
        %v359 = vld [vmem:[#allocation2] sm:$0x80]
        %v360 = vld [vmem:[#allocation2 + $0x8] sm:$0x80]
        %v361 = vld [vmem:[#allocation2 + $0x10] sm:$0xff]
        %v362 = vld [vmem:[#allocation2 + $0x18] sm:$0xff]
        %v363 = vld [vmem:[#allocation2 + $0x20] sm:$0x1]
        %v364 = vld [vmem:[#allocation2 + $0x28] sm:$0x1]
        %371 = vrot.lane.b32.xlu0 %v359, 32
        %v372 = vpop.permute.xlu0 %371
        %373 = vrot.lane.b32.xlu0 %v360, 32
        %v374 = vpop.permute.xlu0 %373
        %375 = vrot.lane.b32.xlu0 %v361, 32
        %v376 = vpop.permute.xlu0 %375
        %377 = vrot.lane.b32.xlu0 %v362, 32
        %v378 = vpop.permute.xlu0 %377
        %379 = vrot.lane.b32.xlu0 %v363, 32
        %v380 = vpop.permute.xlu0 %379
        %381 = vrot.lane.b32.xlu0 %v364, 32
        %v382 = vpop.permute.xlu0 %381
        %vm383 = vcmask 261120
        %v384 = vsel %vm383, %v372, %v374
        %v385 = vsel %vm383, %v376, %v378
        %v386 = vsel %vm383, %v380, %v382
        %vm393 = vcmask 1047815
        %394 = vst.msk [vmem:[#allocation4] sm:$0x80] %vm393, %v372
        %395 = vst [vmem:[#allocation4 + $0x8] sm:$0x80] %v384
        %vm396 = vcmask 1047808
        %397 = vst.msk [vmem:[#allocation4 + $0x10] sm:$0xff] %vm396, %v376
        %398 = vst [vmem:[#allocation4 + $0x18] sm:$0xff] %v385
        %vm399 = vcmask 1040640
        %400 = vst.msk [vmem:[#allocation4 + $0x20] sm:$0x1] %vm399, %v380
        %401 = vst [vmem:[#allocation4 + $0x28] sm:$0x1] %v386
        %vm402 = vcmask 261127
        %403 = vst.msk [vmem:[#allocation4] sm:$0x80] %vm402, 0.0
        %404 = vst.msk [vmem:[#allocation4 + $0x10] sm:$0xff] %vm383, 0.0
        %vm405 = vcmask 253952
        %406 = vst.msk [vmem:[#allocation4 + $0x20] sm:$0x1] %vm405, 0.0
        %v407 = vld [vmem:[#allocation10] sm:$0x77]
        %v408 = vld [vmem:[#allocation10 + $0x8] sm:$0x77]
        %v409 = vld [vmem:[#allocation10 + $0x10] sm:$0x77]
        %v410 = vld [vmem:[%s3] sm:$0x3]
        %v412 = vperm.slane %v410, 0
        %v413 = vperm.slane %v410, 1
        %v416 = vld [vmem:[#allocation4] sm:$0x80]
        %v417 = vld [vmem:[#allocation4 + $0x8] sm:$0x80]
        %v418 = vld [vmem:[#allocation4 + $0x10] sm:$0x7f]
        %v419 = vld [vmem:[#allocation4 + $0x18] sm:$0x7f]
        %v421 = vperm.slane %v407, 0
        %v422 = vperm.slane %v407, 4
        %v425 = vperm.slane %v421, 0
        %v426 = vperm.slane %v422, 0
        %v427 = vmul.f32 %v416, %v425
        %v428 = vmul.f32 %v417, %v426
        %v429 = vmul.f32 %v418, %v425
        %v430 = vmul.f32 %v419, %v426
        %v431 = vadd.f32 %v412, %v427
        %v432 = vadd.f32 %v413, %v428
        %v433 = vadd.f32 %v412, %v429
        %v434 = vadd.f32 %v413, %v430
        %v435 = vld [vmem:[#allocation2] sm:$0x80]
        %v436 = vld [vmem:[#allocation2 + $0x8] sm:$0x80]
        %v437 = vld [vmem:[#allocation2 + $0x10] sm:$0x7f]
        %v438 = vld [vmem:[#allocation2 + $0x18] sm:$0x7f]
        %v439 = vperm.slane %v407, 1
        %v440 = vperm.slane %v407, 5
        %v443 = vperm.slane %v439, 1
        %v444 = vperm.slane %v440, 1
        %v445 = vmul.f32 %v435, %v443
        %v446 = vmul.f32 %v436, %v444
        %v447 = vmul.f32 %v437, %v443
        %v448 = vmul.f32 %v438, %v444
        %v449 = vadd.f32 %v431, %v445
        %v450 = vadd.f32 %v432, %v446
        %v451 = vadd.f32 %v433, %v447
        %v452 = vadd.f32 %v434, %v448
        %v453 = vld [vmem:[#allocation3] sm:$0x80]
        %v454 = vld [vmem:[#allocation3 + $0x8] sm:$0x80]
        %v455 = vld [vmem:[#allocation3 + $0x10] sm:$0x7f]
        %v456 = vld [vmem:[#allocation3 + $0x18] sm:$0x7f]
        %v457 = vperm.slane %v407, 2
        %v458 = vperm.slane %v407, 6
        %v461 = vperm.slane %v457, 2
        %v462 = vperm.slane %v458, 2
        %v463 = vmul.f32 %v453, %v461
        %v464 = vmul.f32 %v454, %v462
        %v465 = vmul.f32 %v455, %v461
        %v466 = vmul.f32 %v456, %v462
        %v467 = vadd.f32 %v449, %v463
        %v468 = vadd.f32 %v450, %v464
        %v469 = vadd.f32 %v451, %v465
        %v470 = vadd.f32 %v452, %v466
        %v471 = vld [vmem:[#allocation4 + $0x10] sm:$0xff]
        %v472 = vld [vmem:[#allocation4 + $0x18] sm:$0xff]
        %v474 = vperm.slane %v408, 0
        %v475 = vperm.slane %v408, 4
        %v478 = vperm.slane %v474, 0
        %v479 = vperm.slane %v475, 0
        %v480 = vmul.f32 %v471, %v478
        %v481 = vmul.f32 %v472, %v479
        %v484 = vrot.slane %v480, 1
        %v485 = vrot.slane %v481, 1
        %v488 = vadd.f32 %v467, %v484
        %v489 = vadd.f32 %v468, %v485
        %v490 = vadd.f32 %v469, %v484
        %v491 = vadd.f32 %v470, %v485
        %v492 = vld [vmem:[#allocation2 + $0x10] sm:$0xff]
        %v493 = vld [vmem:[#allocation2 + $0x18] sm:$0xff]
        %v494 = vperm.slane %v408, 1
        %v495 = vperm.slane %v408, 5
        %v498 = vperm.slane %v494, 1
        %v499 = vperm.slane %v495, 1
        %v500 = vmul.f32 %v492, %v498
        %v501 = vmul.f32 %v493, %v499
        %v504 = vrot.slane %v500, 1
        %v505 = vrot.slane %v501, 1
        %v508 = vadd.f32 %v488, %v504
        %v509 = vadd.f32 %v489, %v505
        %v510 = vadd.f32 %v490, %v504
        %v511 = vadd.f32 %v491, %v505
        %v512 = vld [vmem:[#allocation3 + $0x10] sm:$0xff]
        %v513 = vld [vmem:[#allocation3 + $0x18] sm:$0xff]
        %v514 = vperm.slane %v408, 2
        %v515 = vperm.slane %v408, 6
        %v518 = vperm.slane %v514, 2
        %v519 = vperm.slane %v515, 2
        %v520 = vmul.f32 %v512, %v518
        %v521 = vmul.f32 %v513, %v519
        %v524 = vrot.slane %v520, 1
        %v525 = vrot.slane %v521, 1
        %v528 = vadd.f32 %v508, %v524
        %v529 = vadd.f32 %v509, %v525
        %v530 = vadd.f32 %v510, %v524
        %v531 = vadd.f32 %v511, %v525
        %v532 = vld [vmem:[#allocation4 + $0x10] sm:$0xfe]
        %v533 = vld [vmem:[#allocation4 + $0x18] sm:$0xfe]
        %v534 = vld [vmem:[#allocation4 + $0x20] sm:$0x1]
        %v535 = vld [vmem:[#allocation4 + $0x28] sm:$0x1]
        %v537 = vperm.slane %v409, 0
        %v538 = vperm.slane %v409, 4
        %v541 = vperm.slane %v537, 0
        %v542 = vperm.slane %v538, 0
        %v543 = vmul.f32 %v532, %v541
        %v544 = vmul.f32 %v533, %v542
        %v545 = vmul.f32 %v534, %v541
        %v546 = vmul.f32 %v535, %v542
        %vm551 = vcmask 1045504
        %v552 = vrot.slane %v543, 2
        %v553 = vrot.slane %v544, 2
        %v554 = vrot.slane %v545, 2
        %v555 = vsel %vm551, %v552, %v554
        %v556 = vrot.slane %v546, 2
        %v557 = vsel %vm551, %v553, %v556
        %v562 = vadd.f32 %v528, %v552
        %v563 = vadd.f32 %v529, %v553
        %v564 = vadd.f32 %v530, %v555
        %v565 = vadd.f32 %v531, %v557
        %v566 = vld [vmem:[#allocation2 + $0x10] sm:$0xfe]
        %v567 = vld [vmem:[#allocation2 + $0x18] sm:$0xfe]
        %v568 = vld [vmem:[#allocation2 + $0x20] sm:$0x1]
        %v569 = vld [vmem:[#allocation2 + $0x28] sm:$0x1]
        %v570 = vperm.slane %v409, 1
        %v571 = vperm.slane %v409, 5
        %v574 = vperm.slane %v570, 1
        %v575 = vperm.slane %v571, 1
        %v576 = vmul.f32 %v566, %v574
        %v577 = vmul.f32 %v567, %v575
        %v578 = vmul.f32 %v568, %v574
        %v579 = vmul.f32 %v569, %v575
        %v584 = vrot.slane %v576, 2
        %v585 = vrot.slane %v577, 2
        %v586 = vrot.slane %v578, 2
        %v587 = vsel %vm551, %v584, %v586
        %v588 = vrot.slane %v579, 2
        %v589 = vsel %vm551, %v585, %v588
        %v594 = vadd.f32 %v562, %v584
        %v595 = vadd.f32 %v563, %v585
        %v596 = vadd.f32 %v564, %v587
        %v597 = vadd.f32 %v565, %v589
        %v598 = vld [vmem:[#allocation3 + $0x10] sm:$0xfe]
        %v599 = vld [vmem:[#allocation3 + $0x18] sm:$0xfe]
        %v600 = vld [vmem:[#allocation3 + $0x20] sm:$0x1]
        %v601 = vld [vmem:[#allocation3 + $0x28] sm:$0x1]
        %v602 = vperm.slane %v409, 2
        %v603 = vperm.slane %v409, 6
        %v606 = vperm.slane %v602, 2
        %v607 = vperm.slane %v603, 2
        %v608 = vmul.f32 %v598, %v606
        %v609 = vmul.f32 %v599, %v607
        %v610 = vmul.f32 %v600, %v606
        %v611 = vmul.f32 %v601, %v607
        %v616 = vrot.slane %v608, 2
        %v617 = vrot.slane %v609, 2
        %v618 = vrot.slane %v610, 2
        %v619 = vsel %vm551, %v616, %v618
        %v620 = vrot.slane %v611, 2
        %v621 = vsel %vm551, %v617, %v620
        %v626 = vadd.f32 %v594, %v616
        %v627 = vadd.f32 %v595, %v617
        %v628 = vadd.f32 %v596, %v619
        %v629 = vadd.f32 %v597, %v621
        %vm634 = vcmask 1040384
        %v635 = vrot.slane %v626, 7
        %v636 = vrot.slane %v628, 7
        %v637 = vsel %vm634, %v635, %v636
        %v638 = vrot.slane %v627, 7
        %v639 = vrot.slane %v629, 7
        %v640 = vsel %vm634, %v638, %v639
        %643 = vst [vmem:[%s293] sm:$0xff] %v637
        %644 = vst [vmem:[%s293 + $0x8] sm:$0xff] %v640
        %s645 = sand.u32 %s144, 1
        %s646 = scalar_lea.sflag [#allocation7], %s645
        %s647 = sand.u32 %s144, 1
        %s648 = smul.addr %s647, 16
        %s649 = scalar_lea.vmem [#allocation11], %s648
        // Predicated region
        $region49: #{tpu_custom_call.1} parent=35 // pred_check
          %p650 = pneg %p154
        $region50: #{tpu_custom_call.1} parent=35 // pred_check_branch
          %652 = sbr.rel (%p650) target = $region52
        $region51: #{tpu_custom_call.1} parent=35 // pred_region
          %654 = vsyncadd %s646, 0
          %s655 = smul.addr %s29, 2
          %s656 = smul.addr %s28, 2
          %s657 = sadd.s32 %s655, %s656
          %s658 = smul.addr %s657, 8
          %s659 = scalar_lea.hbm %s4, %s658
          %s661 = sshll.u32 %s649, 4
          %s662 = int_to_ptr.vmem [resolvable:$true] %s661
          %s663 = sshll.u32 %s659, 4
          %s664 = int_to_ptr.hbm [resolvable:$true] %s663
          %666 = dma.vmem_to_hbm [thread:$0]  %s662, 256, %s664, %s646
        $region52: #{tpu_custom_call.1} parent=35 // pred_fallthru
          _
      $region36: #{tpu_custom_call.1} parent=5 // pred_fallthru
        _
      %p667 = scmp.le.s32.totalorder 2, %s19
      // Predicated region
      $region53: #{tpu_custom_call.1} parent=5 // pred_check
        %p668 = pneg %p667
      $region54: #{tpu_custom_call.1} parent=5 // pred_check_branch
        %670 = sbr.rel (%p668) target = $region56
      $region55: #{tpu_custom_call.1} parent=5 // pred_region
        %s671 = ssub.s32 %s19, 2
        // Predicated region
        $region57: #{tpu_custom_call.1} parent=55 // pred_check
          %p672 = pneg %p160
        $region58: #{tpu_custom_call.1} parent=55 // pred_check_branch
          %674 = sbr.rel (%p672) target = $region60
        $region59: #{tpu_custom_call.1} parent=55 // pred_region
          %s675 = sand.u32 %s145, 1
          %s676 = scalar_lea.sflag [#allocation7], %s675
          %s677 = sand.u32 %s145, 1
          %s678 = smul.addr %s677, 16
          %s679 = scalar_lea.vmem [#allocation11], %s678
          %681 = dma.done %s676, 256
        $region60: #{tpu_custom_call.1} parent=55 // pred_fallthru
          _
      $region56: #{tpu_custom_call.1} parent=5 // pred_fallthru
        _
    $region6: #{tpu_custom_call.1} parent=1 // loop_footer
      %s23 = sadd.s32 1, %s19
    $region7: #{tpu_custom_call.1} parent=1 // loop_footer_branch
      %18 = sbr.rel target = $region3
    $region8: #{tpu_custom_call.1} parent=1 // loop_exit
      _
    %682 = vsyncpa [#allocation6], 1
    %s683 = scalar_lea.sflag [#allocation6], 1
    %684 = vsyncpa %s683, 1
    %685 = vsyncpa [#allocation9], 1
    %s686 = scalar_lea.sflag [#allocation9], 1
    %687 = vsyncpa %s686, 1
    %688 = vsyncpa [#allocation7], 1
    %s689 = scalar_lea.sflag [#allocation7], 1
    %690 = vsyncpa %s689, 1

</llo_original>
